<compile_context>
chip_gen: v7x
topology: tpu7x:2x2x1
jax: 0.10.0
libtpu: 0.0.40
codegen_flags: <defaults>
</compile_context>

<pallas_src>
import functools

import jax
import jax.numpy as jnp
from jax import lax
from jax.experimental import pallas as pl
from jax.experimental.pallas import tpu as pltpu


def _polyphase_conv_kernel(x_ref, w_ref, b_ref, o_ref, *, k_eff, l_tile):
    """One (batch, L-tile) grid step of the folded upsample+conv.

    x_ref : (1, Cin, L + k_eff - 1)   original-resolution input, zero-padded
    w_ref : (up*Cout, k_eff*Cin)      polyphase-folded weights
    b_ref : (up*Cout, 1)              per-(phase, cout) bias
    o_ref : (1, up, Cout, l_tile)     phase-major output tile (lane-dense)
    """
    j = pl.program_id(1)
    up, cout = o_ref.shape[1], o_ref.shape[2]

    # Aligned dynamic window of this tile (+ halo of k_eff-1 on the lane axis).
    start = pl.multiple_of(j * l_tile, l_tile)
    window = x_ref[0, :, pl.ds(start, l_tile + k_eff - 1)]   # (Cin, l_tile+k_eff-1)

    # im2col over the k_eff folded taps -> (k_eff*Cin, l_tile), L on lanes.
    xcol = jnp.concatenate([window[:, d:d + l_tile] for d in range(k_eff)],
                           axis=0)

    # Single MXU matmul covering all `up` phases; f32 accumulation.
    acc = jnp.dot(w_ref[...], xcol, preferred_element_type=jnp.float32)
    acc = acc + b_ref[...]                                   # bias, lane-broadcast
    o_ref[0] = acc.reshape(up, cout, l_tile).astype(o_ref.dtype)


def upsample_conv_layer(x, weight, bias, *, kernel_size, upsample, l_tile=128):
    """x: (N, Cin, L) f32; weight: (Cout, Cin, K) (PyTorch Conv1d); bias: (Cout,)."""
    assert kernel_size % 2 == 1, "matches the WaveGAN config (odd kernel_size)"
    n, cin, l_in = x.shape
    cout = weight.shape[0]
    k, up, pad = kernel_size, upsample, kernel_size // 2

    # ---- polyphase fold of the nearest-neighbor upsample (trace-time) ----
    # y[up*q + p] = sum_t w[t] * x[(up*q + p + t - pad) // up]   (zero-padded)
    #            = sum_d Wfold[p, d] * x[q + d + d_min]
    d_min = (0 - pad) // up
    d_max = (up - 1 + k - 1 - pad) // up
    k_eff = d_max - d_min + 1

    wfold = jnp.zeros((up, k_eff, cout, cin), jnp.float32)
    for p in range(up):
        for t in range(k):
            d = (p + t - pad) // up - d_min
            wfold = wfold.at[p, d].add(weight[:, :, t].astype(jnp.float32))
    # rows = (phase, cout), cols = (tap, cin)  — matches the in-kernel im2col.
    w2 = wfold.transpose(0, 2, 1, 3).reshape(up * cout, k_eff * cin)
    b2 = jnp.tile(bias.astype(jnp.float32).reshape(1, cout),
                  (up, 1)).reshape(up * cout, 1)

    # Tiny zero-pad of the ORIGINAL x (halo of |d_min| / d_max elements).
    x_zp = jnp.pad(x, ((0, 0), (0, 0), (-d_min, d_max)))
    l_padded = l_in + k_eff - 1

    # L tiling (lane-dense tiles of 128 when possible; whole row otherwise).
    if l_in % l_tile != 0:
        l_tile = l_in
    num_l_tiles = l_in // l_tile

    kern = functools.partial(_polyphase_conv_kernel, k_eff=k_eff, l_tile=l_tile)
    out_phase = pl.pallas_call(
        kern,
        out_shape=jax.ShapeDtypeStruct((n, up, cout, l_in), x.dtype),
        grid_spec=pltpu.PrefetchScalarGridSpec(
            num_scalar_prefetch=0,
            grid=(n, num_l_tiles),
            in_specs=[
                # Full padded row per batch item; index independent of j, so it
                # is DMA'd once per batch and reused across the inner L tiles.
                pl.BlockSpec((1, cin, l_padded), lambda b, j: (b, 0, 0)),
                pl.BlockSpec((up * cout, k_eff * cin), lambda b, j: (0, 0)),
                pl.BlockSpec((up * cout, 1), lambda b, j: (0, 0)),
            ],
            out_specs=pl.BlockSpec((1, up, cout, l_tile),
                                   lambda b, j: (b, 0, 0, j)),
        ),
        compiler_params=pltpu.CompilerParams(
            dimension_semantics=("parallel", "parallel"),
            vmem_limit_bytes=64 * 1024 * 1024),
    )(x_zp, w2, b2)

    # Interleave phases: (N, up, Cout, L) -> (N, Cout, L, up) -> (N, Cout, L*up).
    out = jnp.transpose(out_phase, (0, 2, 3, 1)).reshape(n, cout, l_in * up)
    return out


def _reference(x, weight, bias, *, kernel_size, upsample):
    """Pure-JAX reference of the same forward pass (correctness check)."""
    pad = kernel_size // 2
    x_up = jnp.repeat(x, upsample, axis=-1)
    x_pad = jnp.pad(x_up, ((0, 0), (0, 0), (pad, pad)))
    out = lax.conv_general_dilated(
        x_pad, weight, window_strides=(1,), padding="VALID",
        dimension_numbers=("NCH", "OIH", "NCH"))
    return out + bias[None, :, None]


if __name__ == "__main__":
    # Small shapes consistent with UpsampleConvLayer(in, out, 25, stride=1, upsample=4).
    N, C_IN, C_OUT, L, K, UP = 2, 16, 8, 256, 25, 4

    key = jax.random.PRNGKey(0)
    kx, kw, kb = jax.random.split(key, 3)

    x = jax.random.uniform(kx, (N, C_IN, L), jnp.float32, minval=-1.0, maxval=1.0)
    # Synthetic Conv1d parameters (PyTorch layout: (Cout, Cin, K)).
    weight = jax.random.normal(kw, (C_OUT, C_IN, K), jnp.float32) * (1.0 / (C_IN * K) ** 0.5)
    bias = jax.random.normal(kb, (C_OUT,), jnp.float32) * 0.01

    out = upsample_conv_layer(x, weight, bias, kernel_size=K, upsample=UP)
    out = jax.block_until_ready(out)

    ref = _reference(x, weight, bias, kernel_size=K, upsample=UP)
    assert out.shape == (N, C_OUT, L * UP), out.shape
    err = float(jnp.max(jnp.abs(out - ref)))
    assert jnp.allclose(out, ref, atol=2e-4, rtol=2e-4), err

    print("KERNEL_OK")
</pallas_src>

<mosaic_0001>
module attributes {stable_mosaic.version = 11 : i64} {
  func.func @_polyphase_conv_kernel(%arg0: i32, %arg1: i32, %arg2: memref<1x16x262xf32, #tpu.memory_space<vmem>>, %arg3: memref<32x112xf32, #tpu.memory_space<vmem>>, %arg4: memref<32x1xf32, #tpu.memory_space<vmem>>, %arg5: memref<1x4x8x128xf32, #tpu.memory_space<vmem>>) attributes {dimension_semantics = [#tpu.dimension_semantics<parallel>, #tpu.dimension_semantics<parallel>], iteration_bounds = array<i64: 2, 2>, scalar_prefetch = 0 : i64, scratch_operands = 0 : i64, tpu.core_type = #tpu.core_type<tc>, window_params = [{transform_indices = @transform_0, window_bounds = array<i64: 1, 16, 262>}, {pipeline_mode = #tpu.pipeline_mode<synchronous>, transform_indices = @transform_1, window_bounds = array<i64: 32, 112>}, {pipeline_mode = #tpu.pipeline_mode<synchronous>, transform_indices = @transform_2, window_bounds = array<i64: 32, 1>}, {transform_indices = @transform_3, window_bounds = array<i64: 1, 4, 8, 128>}]} {
    %c128_i32 = arith.constant 128 : i32
    %0 = arith.muli %arg1, %c128_i32 : i32
    %1 = tpu.assume_multiple %0, 128 : i32
    %c0 = arith.constant 0 : index
    %c0_0 = arith.constant 0 : index
    %2 = arith.index_cast %1 : i32 to index
    %3 = vector.load %arg2[%c0, %c0_0, %2] : memref<1x16x262xf32, #tpu.memory_space<vmem>>, vector<1x16x134xf32>
    %4 = vector.shape_cast %3 : vector<1x16x134xf32> to vector<16x134xf32>
    %5 = vector.extract_strided_slice %4 {offsets = [0, 0], sizes = [16, 128], strides = [1, 1]} : vector<16x134xf32> to vector<16x128xf32>
    %6 = vector.extract_strided_slice %4 {offsets = [0, 1], sizes = [16, 128], strides = [1, 1]} : vector<16x134xf32> to vector<16x128xf32>
    %7 = vector.extract_strided_slice %4 {offsets = [0, 2], sizes = [16, 128], strides = [1, 1]} : vector<16x134xf32> to vector<16x128xf32>
    %8 = vector.extract_strided_slice %4 {offsets = [0, 3], sizes = [16, 128], strides = [1, 1]} : vector<16x134xf32> to vector<16x128xf32>
    %9 = vector.extract_strided_slice %4 {offsets = [0, 4], sizes = [16, 128], strides = [1, 1]} : vector<16x134xf32> to vector<16x128xf32>
    %10 = vector.extract_strided_slice %4 {offsets = [0, 5], sizes = [16, 128], strides = [1, 1]} : vector<16x134xf32> to vector<16x128xf32>
    %11 = vector.extract_strided_slice %4 {offsets = [0, 6], sizes = [16, 128], strides = [1, 1]} : vector<16x134xf32> to vector<16x128xf32>
    %12 = tpu.concatenate %5, %6, %7, %8, %9, %10, %11 in 0 : vector<16x128xf32>, vector<16x128xf32>, vector<16x128xf32>, vector<16x128xf32>, vector<16x128xf32>, vector<16x128xf32>, vector<16x128xf32> -> vector<112x128xf32>
    %c0_1 = arith.constant 0 : index
    %c0_2 = arith.constant 0 : index
    %13 = vector.load %arg3[%c0_1, %c0_2] : memref<32x112xf32, #tpu.memory_space<vmem>>, vector<32x112xf32>
    %cst = arith.constant dense<0.000000e+00> : vector<32x128xf32>
    %14 = tpu.matmul %13, %12, %cst {dimension_numbers = #tpu.dot_dimension_numbers<[1], [0], [0], [1], [0, 0, 1, 1], [], []>} : vector<32x112xf32>, vector<112x128xf32>, vector<32x128xf32> -> vector<32x128xf32>
    %c0_3 = arith.constant 0 : index
    %c0_4 = arith.constant 0 : index
    %15 = vector.load %arg4[%c0_3, %c0_4] : memref<32x1xf32, #tpu.memory_space<vmem>>, vector<32x1xf32>
    %16 = vector.broadcast %15 : vector<32x1xf32> to vector<32x128xf32>
    %17 = arith.addf %14, %16 : vector<32x128xf32>
    %18 = vector.shape_cast %17 : vector<32x128xf32> to vector<4x8x128xf32>
    %c0_5 = arith.constant 0 : index
    %c0_6 = arith.constant 0 : index
    %c0_7 = arith.constant 0 : index
    %c0_8 = arith.constant 0 : index
    %19 = vector.load %arg5[%c0_5, %c0_6, %c0_7, %c0_8] : memref<1x4x8x128xf32, #tpu.memory_space<vmem>>, vector<1x4x8x128xf32>
    %20 = vector.shape_cast %19 : vector<1x4x8x128xf32> to vector<4x8x128xf32>
    %21 = vector.shape_cast %18 : vector<4x8x128xf32> to vector<1x4x8x128xf32>
    tpu.vector_store %arg5[%c0_5, %c0_6, %c0_7, %c0_8], %21 {strides = array<i32>} : memref<1x4x8x128xf32, #tpu.memory_space<vmem>>, vector<1x4x8x128xf32>,
    return
  }
  func.func @transform_0(%arg0: i32, %arg1: i32) -> (i32, i32, i32) {
    %c0_i32 = arith.constant 0 : i32
    %c0_i32_0 = arith.constant 0 : i32
    %c0_i32_1 = arith.constant 0 : i32
    return %arg0, %c0_i32, %c0_i32_0 : i32, i32, i32
  }
  func.func @transform_1(%arg0: i32, %arg1: i32) -> (i32, i32) {
    %c0_i32 = arith.constant 0 : i32
    %c0_i32_0 = arith.constant 0 : i32
    %c0_i32_1 = arith.constant 0 : i32
    return %c0_i32, %c0_i32_0 : i32, i32
  }
  func.func @transform_2(%arg0: i32, %arg1: i32) -> (i32, i32) {
    %c0_i32 = arith.constant 0 : i32
    %c0_i32_0 = arith.constant 0 : i32
    %c0_i32_1 = arith.constant 0 : i32
    return %c0_i32, %c0_i32_0 : i32, i32
  }
  func.func @transform_3(%arg0: i32, %arg1: i32) -> (i32, i32, i32, i32) {
    %c0_i32 = arith.constant 0 : i32
    %c0_i32_0 = arith.constant 0 : i32
    %c0_i32_1 = arith.constant 0 : i32
    return %arg0, %c0_i32, %c0_i32_0, %arg1 : i32, i32, i32, i32
  }
}

</mosaic_0001>

<llo_original>
// kernel: tpu_custom_call.1
$region0: #{tpu_custom_call.1}
  #allocation0 [shape = 'u32[]', space=smem, size = 0x4, offset = 0x4, fixed_abs, tag = 'smem constant byte address 0x4 - core index']
  #allocation1 [shape = 'u32[144,128]{1,0:T(1,128)}', space=vmem, size = 0x12000, scoped, tag = 'internal scratch']
  %s0 = inlined_call_operand.hbm [shape: f32[2,16,262], index: 0, kind: input, shape index: {}]
  %s1 = inlined_call_operand.hbm [shape: f32[32,112], index: 1, kind: input, shape index: {}]
  %s2 = inlined_call_operand.hbm [shape: f32[32,1], index: 2, kind: input, shape index: {}]
  %s3 = inlined_call_operand.hbm [shape: f32[2,4,8,256], index: 3, kind: output, shape index: {}]
  %s4 = sld [smem:[#allocation0]]
  $region57: #{tpu_custom_call.1} parent=0
    _
  %s6 = ssub.s32 1, %s4
  %s7 = scalar_select 0, %s6, %s4
  $region1: #{tpu_custom_call.1} parent=0
    #allocation2 [shape = 'u8[49152]{0}', space=vmem, size = 0xc000, scoped, tag = 'input window, operand 0']
    #allocation3 [shape = 's32[2]{0}', space=sflag, size = 0x8, scoped, tag = 'scoped memory for tpu_custom_call.1']
    #allocation4 [shape = 's32[2]{0}', space=sflag, size = 0x8, scoped, tag = 'scoped memory for tpu_custom_call.1']
    #allocation5 [shape = 'u8[16384]{0}', space=vmem, size = 0x4000, scoped, tag = 'input window, operand 1, single buffered']
    #allocation6 [shape = 's32[1]{0}', space=sflag, size = 0x4, scoped, tag = 'scoped memory for tpu_custom_call.1']
    #allocation7 [shape = 'u8[16384]{0}', space=vmem, size = 0x4000, scoped, tag = 'input window, operand 2, single buffered']
    #allocation8 [shape = 'u8[32768]{0}', space=vmem, size = 0x8000, scoped, tag = 'output window, operand 0']
    %8 = vsyncpa [#allocation3], 0
    %s9 = scalar_lea.sflag [#allocation3], 1
    %10 = vsyncpa %s9, 0
    %11 = vsyncpa [#allocation6], 0
    %12 = vsyncpa [#allocation4], 0
    %s13 = scalar_lea.sflag [#allocation4], 1
    %14 = vsyncpa %s13, 0
    loop: start=0, step=1, limit=6
    $region2: #{tpu_custom_call.1} parent=1 // loop_pre_header
      _
    $region3: #{tpu_custom_call.1} parent=1 // loop_header
      %s16 = sphi 0, %s20
      %p17 = scmp.ge.s32.totalorder %s16, 6
      %s23 = sphi 0, %s35
      %s24 = sphi 0, %s31
      %s25 = sphi 0, %s23
      %s26 = sphi 0, %s24
      %s27 = sphi 0, %s25
      %s28 = sphi 0, %s26
      %s38 = sphi 0, %s40
      %s41 = sphi 0, %s38
      %s42 = sphi 0, %s41
      %s58 = sphi 0, %s42
      %s62 = sphi 0, %s62
      %s64 = sphi 0, %s62
      %s65 = sphi 0, %s64
      %s79 = sphi 0, %s65
      %s83 = sphi 0, %s83
      %s85 = sphi 0, %s83
      %s86 = sphi 0, %s85
      %s100 = sphi 0, %s86
      %s108 = sphi 0, %s110
      %s111 = sphi 0, %s108
      %s112 = sphi 0, %s111
      %s128 = sphi 0, %s112
    $region4: #{tpu_custom_call.1} parent=1 // loop_header_branch
      %19 = sbr.rel (%p17) target = $region8
    $region5: #{tpu_custom_call.1} parent=1 // loop_body
      %s21 = ssub.s32 %s16, 1
      %s22 = ssub.s32 %s16, 2
      %s29 = sadd.s32 1, %s24
      %p30 = scmp.ge.s32.totalorder %s29, 2
      %s31 = scalar_select %p30, 0, %s29
      %s32 = sadd.s32 1, %s23
      %s33 = scalar_select %p30, %s32, %s23
      %p34 = scmp.ge.s32.totalorder %s33, 2
      %s35 = scalar_select %p34, 0, %s33
      %s36 = ssub.s32 %s23, %s35
      %p37 = scmp.eq.s32.totalorder %s36, 0
      %s39 = sadd.s32 %s38, 1
      %s40 = scalar_select %p37, %s38, %s39
      %p43 = pneg %p37
      %p44 = scmp.eq.s32.totalorder %s16, 3
      %p45 = por %p43, %p44
      %p46 = scmp.ne.s32.totalorder %s38, %s41
      %p47 = scmp.eq.s32.totalorder %s16, 0
      %p48 = por %p46, %p47
      %p49 = scmp.ne.s32.totalorder %s38, %s41
      %p50 = scmp.eq.s32.totalorder %s21, 3
      %p51 = por %p49, %p50
      %p52 = scmp.ne.s32.totalorder %s41, %s42
      %p53 = scmp.eq.s32.totalorder %s21, 0
      %p54 = por %p52, %p53
      %p55 = scmp.ne.s32.totalorder %s41, %s42
      %p56 = scmp.eq.s32.totalorder %s22, 3
      %p57 = por %p55, %p56
      %p59 = scmp.ne.s32.totalorder %s42, %s58
      %p60 = scmp.eq.s32.totalorder %s22, 0
      %p61 = por %p59, %p60
      %s63 = sadd.s32 %s62, 1
      %p66 = scmp.eq.s32.totalorder %s16, 3
      %p67 = scmp.ne.s32.totalorder %s62, %s64
      %p68 = scmp.eq.s32.totalorder %s16, 0
      %p69 = por %p67, %p68
      %p70 = scmp.ne.s32.totalorder %s62, %s64
      %p71 = scmp.eq.s32.totalorder %s21, 3
      %p72 = por %p70, %p71
      %p73 = scmp.ne.s32.totalorder %s64, %s65
      %p74 = scmp.eq.s32.totalorder %s21, 0
      %p75 = por %p73, %p74
      %p76 = scmp.ne.s32.totalorder %s64, %s65
      %p77 = scmp.eq.s32.totalorder %s22, 3
      %p78 = por %p76, %p77
      %p80 = scmp.ne.s32.totalorder %s65, %s79
      %p81 = scmp.eq.s32.totalorder %s22, 0
      %p82 = por %p80, %p81
      %s84 = sadd.s32 %s83, 1
      %p87 = scmp.eq.s32.totalorder %s16, 3
      %p88 = scmp.ne.s32.totalorder %s83, %s85
      %p89 = scmp.eq.s32.totalorder %s16, 0
      %p90 = por %p88, %p89
      %p91 = scmp.ne.s32.totalorder %s83, %s85
      %p92 = scmp.eq.s32.totalorder %s21, 3
      %p93 = por %p91, %p92
      %p94 = scmp.ne.s32.totalorder %s85, %s86
      %p95 = scmp.eq.s32.totalorder %s21, 0
      %p96 = por %p94, %p95
      %p97 = scmp.ne.s32.totalorder %s85, %s86
      %p98 = scmp.eq.s32.totalorder %s22, 3
      %p99 = por %p97, %p98
      %p101 = scmp.ne.s32.totalorder %s86, %s100
      %p102 = scmp.eq.s32.totalorder %s22, 0
      %p103 = por %p101, %p102
      %s104 = ssub.s32 %s23, %s35
      %s105 = ssub.s32 %s24, %s31
      %s106 = sor.u32 %s104, %s105
      %p107 = scmp.eq.s32.totalorder %s106, 0
      %s109 = sadd.s32 %s108, 1
      %s110 = scalar_select %p107, %s108, %s109
      %p113 = pneg %p107
      %p114 = scmp.eq.s32.totalorder %s16, 3
      %p115 = por %p113, %p114
      %p116 = scmp.ne.s32.totalorder %s108, %s111
      %p117 = scmp.eq.s32.totalorder %s16, 0
      %p118 = por %p116, %p117
      %p119 = scmp.ne.s32.totalorder %s108, %s111
      %p120 = scmp.eq.s32.totalorder %s21, 3
      %p121 = por %p119, %p120
      %p122 = scmp.ne.s32.totalorder %s111, %s112
      %p123 = scmp.eq.s32.totalorder %s21, 0
      %p124 = por %p122, %p123
      %p125 = scmp.ne.s32.totalorder %s111, %s112
      %p126 = scmp.eq.s32.totalorder %s22, 3
      %p127 = por %p125, %p126
      %p129 = scmp.ne.s32.totalorder %s112, %s128
      %p130 = scmp.eq.s32.totalorder %s22, 0
      %p131 = por %p129, %p130
      %p132 = scmp.le.s32.totalorder 1, %s16
      %p133 = scmp.lt.s32.totalorder %s16, 5
      %p134 = pnand %p132, %p133
      %p135 = pneg %p134
      // Predicated region
      $region9: #{tpu_custom_call.1} parent=5 // pred_check
        _
      $region10: #{tpu_custom_call.1} parent=5 // pred_check_branch
        %137 = sbr.rel (%p134) target = $region12
      $region11: #{tpu_custom_call.1} parent=5 // pred_region
        %s138 = ssub.s32 %s16, 1
        // Predicated region
        $region13: #{tpu_custom_call.1} parent=11 // pred_check
          %p139 = pneg %p75
        $region14: #{tpu_custom_call.1} parent=11 // pred_check_branch
          %141 = sbr.rel (%p139) target = $region16
        $region15: #{tpu_custom_call.1} parent=11 // pred_region
          %s143 = ssub.s32 512, 512
          %144 = vsyncadd [#allocation6], %s143
          %s145 = sshll.u32 [#allocation5], 4
          %s146 = int_to_ptr.vmem [resolvable:$true] %s145
          %151 = dma.hbm_to_vmem [thread:$0]  %s1, 512, %s146, [#allocation6], 128, 128, 8
        $region16: #{tpu_custom_call.1} parent=11 // pred_fallthru
          _
        // Predicated region
        $region17: #{tpu_custom_call.1} parent=11 // pred_check
          %p152 = pneg %p96
        $region18: #{tpu_custom_call.1} parent=11 // pred_check_branch
          %154 = sbr.rel (%p152) target = $region20
        $region19: #{tpu_custom_call.1} parent=11 // pred_region
          %s156 = ssub.s32 512, 512
          %157 = vsyncadd [#allocation6], %s156
          %s158 = sshll.u32 [#allocation7], 4
          %s159 = int_to_ptr.vmem [resolvable:$true] %s158
          %164 = dma.hbm_to_vmem [thread:$0]  %s2, 512, %s159, [#allocation6], 128, 128, 8
        $region20: #{tpu_custom_call.1} parent=11 // pred_fallthru
          _
      $region12: #{tpu_custom_call.1} parent=5 // pred_fallthru
        _
      %p165 = scmp.lt.s32.totalorder %s16, 4
      // Predicated region
      $region21: #{tpu_custom_call.1} parent=5 // pred_check
        %p166 = pneg %p165
      $region22: #{tpu_custom_call.1} parent=5 // pred_check_branch
        %168 = sbr.rel (%p166) target = $region24
      $region23: #{tpu_custom_call.1} parent=5 // pred_region
        // Predicated region
        $region25: #{tpu_custom_call.1} parent=23 // pred_check
          %p169 = pneg %p48
        $region26: #{tpu_custom_call.1} parent=23 // pred_check_branch
          %171 = sbr.rel (%p169) target = $region28
        $region27: #{tpu_custom_call.1} parent=23 // pred_region
          %s172 = sand.u32 %s38, 1
          %s173 = scalar_lea.sflag [#allocation3], %s172
          %s174 = sand.u32 %s38, 1
          %s175 = smul.addr %s174, 48
          %s176 = scalar_lea.vmem [#allocation2], %s175
          %s178 = ssub.s32 768, 768
          %179 = vsyncadd %s173, %s178
          %s180 = smul.addr %s23, 6
          %s181 = smul.addr %s180, 128
          %s182 = scalar_lea.hbm %s0, %s181
          %s183 = sshll.u32 %s176, 4
          %s184 = int_to_ptr.vmem [resolvable:$true] %s183
          %189 = dma.hbm_to_vmem [thread:$0]  %s182, 768, %s184, %s173, 384, 384, 24
        $region28: #{tpu_custom_call.1} parent=23 // pred_fallthru
          _
      $region24: #{tpu_custom_call.1} parent=5 // pred_fallthru
        _
      %p190 = scmp.le.s32.totalorder 1, %s16
      %p191 = scmp.lt.s32.totalorder %s16, 5
      %p192 = pnand %p190, %p191
      %p193 = pneg %p192
      // Predicated region
      $region29: #{tpu_custom_call.1} parent=5 // pred_check
        _
      $region30: #{tpu_custom_call.1} parent=5 // pred_check_branch
        %195 = sbr.rel (%p192) target = $region32
      $region31: #{tpu_custom_call.1} parent=5 // pred_region
        %s196 = ssub.s32 %s16, 1
        %s197 = sand.u32 %s41, 1
        %s198 = scalar_lea.sflag [#allocation3], %s197
        %s199 = sand.u32 %s41, 1
        %s200 = smul.addr %s199, 48
        %s201 = scalar_lea.vmem [#allocation2], %s200
        // Predicated region
        $region33: #{tpu_custom_call.1} parent=31 // pred_check
          %p202 = pneg %p54
        $region34: #{tpu_custom_call.1} parent=31 // pred_check_branch
          %204 = sbr.rel (%p202) target = $region36
        $region35: #{tpu_custom_call.1} parent=31 // pred_region
          %205 = dma.done %s198, 768
        $region36: #{tpu_custom_call.1} parent=31 // pred_fallthru
          _
        // Predicated region
        $region37: #{tpu_custom_call.1} parent=31 // pred_check
          %p206 = pneg %p75
        $region38: #{tpu_custom_call.1} parent=31 // pred_check_branch
          %208 = sbr.rel (%p206) target = $region40
        $region39: #{tpu_custom_call.1} parent=31 // pred_region
          %209 = dma.done [#allocation6], 512
        $region40: #{tpu_custom_call.1} parent=31 // pred_fallthru
          _
        // Predicated region
        $region41: #{tpu_custom_call.1} parent=31 // pred_check
          %p210 = pneg %p96
        $region42: #{tpu_custom_call.1} parent=31 // pred_check_branch
          %212 = sbr.rel (%p210) target = $region44
        $region43: #{tpu_custom_call.1} parent=31 // pred_region
          %213 = dma.done [#allocation6], 512
        $region44: #{tpu_custom_call.1} parent=31 // pred_fallthru
          _
        %s214 = sand.u32 %s41, 1
        %s215 = scalar_lea.sflag [#allocation3], %s214
        %s216 = sand.u32 %s41, 1
        %s217 = smul.addr %s216, 48
        %s218 = scalar_lea.vmem [#allocation2], %s217
        %p219 = pneg %p54
        %p220 = pneg %p51
        %p221 = pneg %p75
        %p222 = pneg %p72
        %p223 = pneg %p96
        %p224 = pneg %p93
        %p225 = pneg %p124
        %p226 = pneg %p121
        %s227 = sand.u32 %s111, 1
        %s228 = scalar_lea.sflag [#allocation4], %s227
        %s229 = sand.u32 %s111, 1
        %s230 = smul.addr %s229, 32
        %s231 = scalar_lea.vmem [#allocation8], %s230
        %s232 = smul.u32 %s26, 128
        %s233 = sshra.s32 %s232, 7
        %s234 = sand.u32 %s232, 127
        %s235 = smul.addr %s233, 8
        %s236 = scalar_lea.vmem %s201, %s235 [#allocation2]
        %v237 = vld [vmem:[%s236] sm:$0xff]
        %v238 = vld [vmem:[%s236 + $0x8] sm:$0xff]
        %v239 = vld [vmem:[%s236 + $0x18] sm:$0xff]
        %v240 = vld [vmem:[%s236 + $0x20] sm:$0xff]
        %245 = vrot.lane.b32.xlu0 %v237, 127
        %v246 = vpop.permute.xlu0 %245
        %247 = vrot.lane.b32.xlu0 %v238, 127
        %v248 = vpop.permute.xlu0 %247
        %249 = vrot.lane.b32.xlu0 %v239, 127
        %v250 = vpop.permute.xlu0 %249
        %251 = vrot.lane.b32.xlu0 %v240, 127
        %v252 = vpop.permute.xlu0 %251
        %vm253 = vcmask 1039360
        %v254 = vsel %vm253, %v246, %v248
        %v255 = vsel %vm253, %v250, %v252
        %258 = vrot.lane.b32.xlu0 %v237, 126
        %v259 = vpop.permute.xlu0 %258
        %260 = vrot.lane.b32.xlu0 %v238, 126
        %v261 = vpop.permute.xlu0 %260
        %262 = vrot.lane.b32.xlu0 %v239, 126
        %v263 = vpop.permute.xlu0 %262
        %264 = vrot.lane.b32.xlu0 %v240, 126
        %v265 = vpop.permute.xlu0 %264
        %vm266 = vcmask 1031168
        %v267 = vsel %vm266, %v259, %v261
        %v268 = vsel %vm266, %v263, %v265
        %271 = vrot.lane.b32.xlu0 %v237, 125
        %v272 = vpop.permute.xlu0 %271
        %273 = vrot.lane.b32.xlu0 %v238, 125
        %v274 = vpop.permute.xlu0 %273
        %275 = vrot.lane.b32.xlu0 %v239, 125
        %v276 = vpop.permute.xlu0 %275
        %277 = vrot.lane.b32.xlu0 %v240, 125
        %v278 = vpop.permute.xlu0 %277
        %vm279 = vcmask 1022976
        %v280 = vsel %vm279, %v272, %v274
        %v281 = vsel %vm279, %v276, %v278
        %284 = vrot.lane.b32.xlu0 %v237, 124
        %v285 = vpop.permute.xlu0 %284
        %286 = vrot.lane.b32.xlu0 %v238, 124
        %v287 = vpop.permute.xlu0 %286
        %288 = vrot.lane.b32.xlu0 %v239, 124
        %v289 = vpop.permute.xlu0 %288
        %290 = vrot.lane.b32.xlu0 %v240, 124
        %v291 = vpop.permute.xlu0 %290
        %vm292 = vcmask 1014784
        %v293 = vsel %vm292, %v285, %v287
        %v294 = vsel %vm292, %v289, %v291
        %297 = vrot.lane.b32.xlu0 %v237, 123
        %v298 = vpop.permute.xlu0 %297
        %299 = vrot.lane.b32.xlu0 %v238, 123
        %v300 = vpop.permute.xlu0 %299
        %301 = vrot.lane.b32.xlu0 %v239, 123
        %v302 = vpop.permute.xlu0 %301
        %303 = vrot.lane.b32.xlu0 %v240, 123
        %v304 = vpop.permute.xlu0 %303
        %vm305 = vcmask 1006592
        %v306 = vsel %vm305, %v298, %v300
        %v307 = vsel %vm305, %v302, %v304
        %310 = vrot.lane.b32.xlu0 %v237, 122
        %v311 = vpop.permute.xlu0 %310
        %312 = vrot.lane.b32.xlu0 %v238, 122
        %v313 = vpop.permute.xlu0 %312
        %314 = vrot.lane.b32.xlu0 %v239, 122
        %v315 = vpop.permute.xlu0 %314
        %316 = vrot.lane.b32.xlu0 %v240, 122
        %v317 = vpop.permute.xlu0 %316
        %vm318 = vcmask 998400
        %v319 = vsel %vm318, %v311, %v313
        %v320 = vsel %vm318, %v315, %v317
        %v323 = vld [vmem:[#allocation5] sm:$0xff]
        %v324 = vld [vmem:[#allocation5 + $0x8] sm:$0xff]
        %v325 = vld [vmem:[#allocation5 + $0x10] sm:$0xff]
        %v326 = vld [vmem:[#allocation5 + $0x18] sm:$0xff]
        %v327 = vld [vmem:[#allocation7] sm:$0xff]
        %v328 = vld [vmem:[#allocation7 + $0x8] sm:$0xff]
        %v329 = vld [vmem:[#allocation7 + $0x10] sm:$0xff]
        %v330 = vld [vmem:[#allocation7 + $0x18] sm:$0xff]
        %332 = vset.pattern.permute.xlu0 0
        %333 = vperm.xlu0 %332, %v327
        %v334 = vpop.permute.xlu0 %333
        %337 = vset.pattern.permute.xlu0 0
        %338 = vperm.xlu0 %337, %v328
        %v339 = vpop.permute.xlu0 %338
        %342 = vset.pattern.permute.xlu0 0
        %343 = vperm.xlu0 %342, %v329
        %v344 = vpop.permute.xlu0 %343
        %347 = vset.pattern.permute.xlu0 0
        %348 = vperm.xlu0 %347, %v330
        %v349 = vpop.permute.xlu0 %348
        %vm351 = vcmask 916480
        %v353 = vsel %vm351, %v323, 0
        %v356 = vsel %vm351, %v324, 0
        %v359 = vsel %vm351, %v325, 0
        %v362 = vsel %vm351, %v326, 0
        %364 = vmatprep.subr.mxu0 0.0
        %365 = vmatpush1.msra.mxu0 %v237
        %366 = vmatprep.subr.mxu0 0.0
        %367 = vmatpush1.msra.mxu0 %v239
        %368 = vmatprep.subr.mxu0 0.0
        %369 = vmatpush1.msra.mxu0 %v254
        %370 = vmatprep.subr.mxu0 0.0
        %371 = vmatpush1.msra.mxu0 %v255
        %372 = vmatprep.subr.mxu0 0.0
        %373 = vmatpush1.msra.mxu0 %v267
        %374 = vmatprep.subr.mxu0 0.0
        %375 = vmatpush1.msra.mxu0 %v268
        %376 = vmatprep.subr.mxu0 0.0
        %377 = vmatpush1.msra.mxu0 %v280
        %378 = vmatprep.subr.mxu0 0.0
        %379 = vmatpush1.msra.mxu0 %v281
        %380 = vmatprep.subr.mxu0 0.0
        %381 = vmatpush1.msra.mxu0 %v293
        %382 = vmatprep.subr.mxu0 0.0
        %383 = vmatpush1.msra.mxu0 %v294
        %384 = vmatprep.subr.mxu0 0.0
        %385 = vmatpush1.msra.mxu0 %v306
        %386 = vmatprep.subr.mxu0 0.0
        %387 = vmatpush1.msra.mxu0 %v307
        %388 = vmatprep.subr.mxu0 0.0
        %389 = vmatpush1.msra.mxu0 %v319
        %390 = vmatprep.subr.mxu0 0.0
        %391 = vmatpush1.msra.mxu0 %v320
        %392 = vmatprep.subr.mxu0 0.0
        %393 = vmatpush1.msra.mxu0 0.0
        %394 = vmatprep.subr.mxu0 0.0
        %395 = vmatpush1.msra.mxu0 0.0
        %396 = vmatprep.subr.mxu0 0.0
        %397 = vmatpush1.msra.mxu0 0.0
        %398 = vmatprep.subr.mxu0 0.0
        %399 = vmatpush1.msra.mxu0 0.0
        %400 = vmatprep.subr.mxu0 0.0
        %401 = vmatpush1.msra.mxu0 0.0
        %402 = vmatprep.subr.mxu0 0.0
        %403 = vmatpush1.msra.mxu0 0.0
        %404 = vmatprep.subr.mxu0 0.0
        %405 = vmatpush1.msra.mxu0 0.0
        %406 = vmatprep.subr.mxu0 0.0
        %407 = vmatpush1.msra.mxu0 0.0
        %408 = vmatprep.subr.mxu0 0.0
        %409 = vmatpush1.msra.mxu0 0.0
        %410 = vmatprep.subr.mxu0 0.0
        %411 = vmatpush1.msra.mxu0 0.0
        %412 = vmatprep.subr.mxu0 0.0
        %413 = vmatpush1.msra.mxu0 0.0
        %414 = vmatprep.subr.mxu0 0.0
        %415 = vmatpush1.msra.mxu0 0.0
        %416 = vmatprep.subr.mxu0 0.0
        %417 = vmatpush1.msra.mxu0 0.0
        %418 = vmatprep.subr.mxu0 0.0
        %419 = vmatpush1.msra.mxu0 0.0
        %420 = vmatprep.subr.mxu0 0.0
        %421 = vmatpush1.msra.mxu0 0.0
        %422 = vmatprep.subr.mxu0 0.0
        %423 = vmatpush1.msra.mxu0 0.0
        %424 = vmatprep.subr.mxu0 0.0
        %425 = vmatpush1.msra.mxu0 0.0
        %426 = vmatprep.subr.mxu0 0.0
        %427 = vmatpush1.msra.mxu0 0.0
        %428 = vmatprep.mubr.f32.mxu0 0.0
        %429 = vmatmul.mubr.f32.gmra.mrb[0].mxu0 %v353
        %v430 = vpop.f32.mrb[0].mxu0
        %v431 = vadd.f32 %v334, %v430
        %v432 = vpop.f32.mrb[0].mxu0
        %433 = vmatprep.mubr.f32.mxu0 0.0
        %434 = vmatmul.mubr.f32.gmra.mrb[0].mxu0 %v356
        %v435 = vpop.f32.mrb[0].mxu0
        %v436 = vadd.f32 %v339, %v435
        %v437 = vpop.f32.mrb[0].mxu0
        %438 = vmatprep.mubr.f32.mxu0 0.0
        %439 = vmatmul.mubr.f32.gmra.mrb[0].mxu0 %v359
        %v440 = vpop.f32.mrb[0].mxu0
        %v441 = vadd.f32 %v344, %v440
        %v442 = vpop.f32.mrb[0].mxu0
        %443 = vmatprep.mubr.f32.mxu0 0.0
        %444 = vmatmul.mubr.f32.gmra.mrb[0].mxu0 %v362
        %v445 = vpop.f32.mrb[0].mxu0
        %v446 = vadd.f32 %v349, %v445
        %v447 = vpop.f32.mrb[0].mxu0
        %448 = vdwg.mxu0
        %449 = vst [vmem:[%s231] sm:$0xff] %v431
        %450 = vst [vmem:[%s231 + $0x8] sm:$0xff] %v436
        %451 = vst [vmem:[%s231 + $0x10] sm:$0xff] %v441
        %452 = vst [vmem:[%s231 + $0x18] sm:$0xff] %v446
        %s453 = sand.u32 %s111, 1
        %s454 = scalar_lea.sflag [#allocation4], %s453
        %s455 = sand.u32 %s111, 1
        %s456 = smul.addr %s455, 32
        %s457 = scalar_lea.vmem [#allocation8], %s456
        // Predicated region
        $region45: #{tpu_custom_call.1} parent=31 // pred_check
          %p458 = pneg %p121
        $region46: #{tpu_custom_call.1} parent=31 // pred_check_branch
          %460 = sbr.rel (%p458) target = $region48
        $region47: #{tpu_custom_call.1} parent=31 // pred_region
          %s462 = ssub.s32 512, 512
          %463 = vsyncadd %s454, %s462
          %s464 = smul.addr %s25, 8
          %s465 = sadd.s32 %s26, %s464
          %s466 = smul.addr %s465, 128
          %s467 = scalar_lea.hbm %s3, %s466
          %s468 = sshll.u32 %s457, 4
          %s469 = int_to_ptr.vmem [resolvable:$true] %s468
          %474 = dma.vmem_to_hbm [thread:$0]  %s469, 512, %s467, %s454, 128, 256, 8
        $region48: #{tpu_custom_call.1} parent=31 // pred_fallthru
          _
      $region32: #{tpu_custom_call.1} parent=5 // pred_fallthru
        _
      %p475 = scmp.le.s32.totalorder 2, %s16
      // Predicated region
      $region49: #{tpu_custom_call.1} parent=5 // pred_check
        %p476 = pneg %p475
      $region50: #{tpu_custom_call.1} parent=5 // pred_check_branch
        %478 = sbr.rel (%p476) target = $region52
      $region51: #{tpu_custom_call.1} parent=5 // pred_region
        %s479 = ssub.s32 %s16, 2
        // Predicated region
        $region53: #{tpu_custom_call.1} parent=51 // pred_check
          %p480 = pneg %p127
        $region54: #{tpu_custom_call.1} parent=51 // pred_check_branch
          %482 = sbr.rel (%p480) target = $region56
        $region55: #{tpu_custom_call.1} parent=51 // pred_region
          %s483 = sand.u32 %s112, 1
          %s484 = scalar_lea.sflag [#allocation4], %s483
          %s485 = sand.u32 %s112, 1
          %s486 = smul.addr %s485, 32
          %s487 = scalar_lea.vmem [#allocation8], %s486
          %488 = dma.done %s484, 512
        $region56: #{tpu_custom_call.1} parent=51 // pred_fallthru
          _
      $region52: #{tpu_custom_call.1} parent=5 // pred_fallthru
        _
    $region6: #{tpu_custom_call.1} parent=1 // loop_footer
      %s20 = sadd.s32 1, %s16
    $region7: #{tpu_custom_call.1} parent=1 // loop_footer_branch
      %15 = sbr.rel target = $region3
    $region8: #{tpu_custom_call.1} parent=1 // loop_exit
      _
    %489 = vsyncpa [#allocation3], 1
    %s490 = scalar_lea.sflag [#allocation3], 1
    %491 = vsyncpa %s490, 1
    %492 = vsyncpa [#allocation6], 1
    %493 = vsyncpa [#allocation4], 1
    %s494 = scalar_lea.sflag [#allocation4], 1
    %495 = vsyncpa %s494, 1

</llo_original>
